<compile_context>
chip_gen: v6e
topology: v6e:2x2x1
jax: 0.10.0
libtpu: 0.0.40
codegen_flags: <defaults>
</compile_context>

<pallas_src>
import math

import jax
import jax.numpy as jnp
from jax import lax
from jax.experimental import pallas as pl
from jax.experimental.pallas import tpu as pltpu


def _round_up(x, m):
    return ((x + m - 1) // m) * m


def _positive_embed_kernel(idx_ref, w_ref, out_ref, acc_ref):
    # idx_ref: (TILE_T, 1) int32  — token ids for this token tile
    # w_ref:   (TILE_V, D) float32 — raw table slice for this vocab tile
    # out_ref: (TILE_T, D) float32 — dense output block (resident across vocab axis)
    # acc_ref: (TILE_T, D) float32 VMEM scratch accumulator
    v_step = pl.program_id(1)
    tile_t = out_ref.shape[0]
    tile_v = w_ref.shape[0]

    @pl.when(v_step == 0)
    def _():
        acc_ref[...] = jnp.zeros_like(acc_ref)

    # One-hot selector for this vocab tile: onehot[t, v] = (idx[t] == v_base + v).
    v_base = v_step * tile_v
    ids = idx_ref[...]                                              # (TILE_T, 1)
    col = v_base + lax.broadcasted_iota(jnp.int32, (tile_t, tile_v), 1)
    onehot = (ids == col).astype(w_ref.dtype)                       # (TILE_T, TILE_V)

    # Exact row gather on the MXU (each output element = 1.0 * raw[tok, d]).
    acc_ref[...] += jnp.dot(onehot, w_ref[...],
                            preferred_element_type=jnp.float32)

    @pl.when(v_step == pl.num_programs(1) - 1)
    def _():
        # Cheap stable softplus: max(x, 0) + log1p(exp(-|x|)).
        x = acc_ref[...]
        out_ref[...] = (jnp.maximum(x, 0.0)
                        + jnp.log1p(jnp.exp(-jnp.abs(x)))).astype(out_ref.dtype)


def positive_embedding_hk(idx, raw, *, tile_t=256, tile_v=512):
    """idx: (B, S) int, raw: (V, D) float32 -> (B, S, D) float32 == softplus(raw)[idx]."""
    B, S = idx.shape
    V, D = raw.shape
    T = B * S

    # Flatten tokens and clamp ids (no runtime bounds checks on TPU).
    idx_flat = jnp.clip(idx.reshape(T).astype(jnp.int32), 0, V - 1)

    # Tile sizes: sublane axis of blocks must be a multiple of 8 (or full extent).
    tile_t = min(tile_t, _round_up(T, 8))
    t_pad = _round_up(T, tile_t)
    tile_v = min(tile_v, _round_up(V, 8))
    v_pad = _round_up(V, tile_v)

    if t_pad != T:
        idx_flat = jnp.pad(idx_flat, (0, t_pad - T))          # pad tokens -> id 0
    raw_p = raw if v_pad == V else jnp.pad(raw, ((0, v_pad - V), (0, 0)))

    idx_col = idx_flat.reshape(t_pad, 1)                       # (T_pad, 1) column of ids
    n_t = t_pad // tile_t
    n_v = v_pad // tile_v

    out_flat = pl.pallas_call(
        _positive_embed_kernel,
        out_shape=jax.ShapeDtypeStruct((t_pad, D), raw.dtype),
        grid=(n_t, n_v),
        in_specs=[
            pl.BlockSpec((tile_t, 1), lambda t, v: (t, 0)),    # token-id tile
            pl.BlockSpec((tile_v, D), lambda t, v: (v, 0)),    # streamed vocab tile
        ],
        out_specs=pl.BlockSpec((tile_t, D), lambda t, v: (t, 0)),
        scratch_shapes=[pltpu.VMEM((tile_t, D), jnp.float32)],
        compiler_params=pltpu.CompilerParams(
            dimension_semantics=("parallel", "arbitrary")),
    )(idx_col, raw_p)

    return out_flat[:T].reshape(B, S, D)


def init_raw(key, vocab_size, embed_dim):
    mean = math.log(math.sqrt(2.0 / vocab_size))
    std = 0.2
    return mean + std * jax.random.normal(
        key, (vocab_size, embed_dim), dtype=jnp.float32)


if __name__ == "__main__":
    vocab_size, embed_dim = 32, 32
    B, S = 2, 8

    key = jax.random.PRNGKey(0)
    k_raw, k_idx = jax.random.split(key)

    raw = init_raw(k_raw, vocab_size, embed_dim)
    idx = jax.random.randint(k_idx, (B, S), 0, vocab_size, dtype=jnp.int32)

    out = positive_embedding_hk(idx, raw)
    out = jax.block_until_ready(out)

    # Pure-JAX reference check.
    ref = jax.nn.softplus(raw)[idx]
    assert out.shape == (B, S, embed_dim)
    assert jnp.allclose(out, ref, atol=1e-5, rtol=1e-5)

    print("KERNEL_OK")
</pallas_src>

<mosaic_0001>
module attributes {stable_mosaic.version = 11 : i64} {
  func.func @_positive_embed_kernel(%arg0: i32, %arg1: i32, %arg2: memref<16x1xi32, #tpu.memory_space<vmem>>, %arg3: memref<32x32xf32, #tpu.memory_space<vmem>>, %arg4: memref<16x32xf32, #tpu.memory_space<vmem>>, %arg5: memref<16x32xf32, #tpu.memory_space<vmem>>) attributes {dimension_semantics = [#tpu.dimension_semantics<parallel>, #tpu.dimension_semantics<arbitrary>], iteration_bounds = array<i64: 1, 1>, scalar_prefetch = 0 : i64, scratch_operands = 1 : i64, tpu.core_type = #tpu.core_type<tc>, window_params = [{transform_indices = @transform_0, window_bounds = array<i64: 16, 1>}, {transform_indices = @transform_1, window_bounds = array<i64: 32, 32>}, {transform_indices = @transform_2, window_bounds = array<i64: 16, 32>}]} {
    %c0_i32 = arith.constant 0 : i32
    %0 = arith.cmpi eq, %arg1, %c0_i32 : i32
    %1 = arith.extui %0 : i1 to i32
    %c0_i32_0 = arith.constant 0 : i32
    %2 = arith.cmpi ne, %1, %c0_i32_0 : i32
    scf.if %2 {
      %cst_10 = arith.constant 0.000000e+00 : f32
      %20 = vector.broadcast %cst_10 : f32 to vector<16x32xf32>
      %c0_11 = arith.constant 0 : index
      %c0_12 = arith.constant 0 : index
      %21 = vector.load %arg5[%c0_11, %c0_12] : memref<16x32xf32, #tpu.memory_space<vmem>>, vector<16x32xf32>
      tpu.vector_store %arg5[%c0_11, %c0_12], %20 {strides = array<i32>} : memref<16x32xf32, #tpu.memory_space<vmem>>, vector<16x32xf32>,
    } else {
    }
    %c32_i32 = arith.constant 32 : i32
    %3 = arith.muli %arg1, %c32_i32 : i32
    %c0 = arith.constant 0 : index
    %c0_1 = arith.constant 0 : index
    %4 = vector.load %arg2[%c0, %c0_1] : memref<16x1xi32, #tpu.memory_space<vmem>>, vector<16x1xi32>
    %5 = tpu.iota {dimensions = array<i32: 1>} : vector<16x32xi32>
    %6 = vector.broadcast %3 : i32 to vector<16x32xi32>
    %7 = arith.addi %6, %5 : vector<16x32xi32>
    %8 = vector.broadcast %4 : vector<16x1xi32> to vector<16x32xi32>
    %9 = arith.cmpi eq, %8, %7 : vector<16x32xi32>
    %10 = arith.extui %9 : vector<16x32xi1> to vector<16x32xi32>
    %11 = arith.sitofp %10 : vector<16x32xi32> to vector<16x32xf32>
    %c0_2 = arith.constant 0 : index
    %c0_3 = arith.constant 0 : index
    %12 = vector.load %arg5[%c0_2, %c0_3] : memref<16x32xf32, #tpu.memory_space<vmem>>, vector<16x32xf32>
    %c0_4 = arith.constant 0 : index
    %c0_5 = arith.constant 0 : index
    %13 = vector.load %arg3[%c0_4, %c0_5] : memref<32x32xf32, #tpu.memory_space<vmem>>, vector<32x32xf32>
    %cst = arith.constant dense<0.000000e+00> : vector<16x32xf32>
    %14 = tpu.matmul %11, %13, %cst {dimension_numbers = #tpu.dot_dimension_numbers<[1], [0], [0], [1], [0, 0, 1, 1], [], []>} : vector<16x32xf32>, vector<32x32xf32>, vector<16x32xf32> -> vector<16x32xf32>
    %15 = arith.addf %12, %14 : vector<16x32xf32>
    %c0_6 = arith.constant 0 : index
    %c0_7 = arith.constant 0 : index
    %16 = vector.load %arg5[%c0_6, %c0_7] : memref<16x32xf32, #tpu.memory_space<vmem>>, vector<16x32xf32>
    tpu.vector_store %arg5[%c0_6, %c0_7], %15 {strides = array<i32>} : memref<16x32xf32, #tpu.memory_space<vmem>>, vector<16x32xf32>,
    %c0_i32_8 = arith.constant 0 : i32
    %17 = arith.cmpi eq, %arg1, %c0_i32_8 : i32
    %18 = arith.extui %17 : i1 to i32
    %c0_i32_9 = arith.constant 0 : i32
    %19 = arith.cmpi ne, %18, %c0_i32_9 : i32
    scf.if %19 {
      %c0_10 = arith.constant 0 : index
      %c0_11 = arith.constant 0 : index
      %20 = vector.load %arg5[%c0_10, %c0_11] : memref<16x32xf32, #tpu.memory_space<vmem>>, vector<16x32xf32>
      %cst_12 = arith.constant 0.000000e+00 : f32
      %21 = vector.broadcast %cst_12 : f32 to vector<16x32xf32>
      %22 = arith.maximumf %20, %21 : vector<16x32xf32>
      %23 = math.absf %20 : vector<16x32xf32>
      %cst_13 = arith.constant 0.000000e+00 : f32
      %24 = vector.broadcast %cst_13 : f32 to vector<16x32xf32>
      %25 = arith.subf %24, %23 : vector<16x32xf32>
      %26 = math.exp %25 : vector<16x32xf32>
      %27 = math.log1p %26 : vector<16x32xf32>
      %28 = arith.addf %22, %27 : vector<16x32xf32>
      %c0_14 = arith.constant 0 : index
      %c0_15 = arith.constant 0 : index
      %29 = vector.load %arg4[%c0_14, %c0_15] : memref<16x32xf32, #tpu.memory_space<vmem>>, vector<16x32xf32>
      tpu.vector_store %arg4[%c0_14, %c0_15], %28 {strides = array<i32>} : memref<16x32xf32, #tpu.memory_space<vmem>>, vector<16x32xf32>,
    } else {
    }
    return
  }
  func.func @transform_0(%arg0: i32, %arg1: i32) -> (i32, i32) {
    %c0_i32 = arith.constant 0 : i32
    %c0_i32_0 = arith.constant 0 : i32
    return %arg0, %c0_i32 : i32, i32
  }
  func.func @transform_1(%arg0: i32, %arg1: i32) -> (i32, i32) {
    %c0_i32 = arith.constant 0 : i32
    %c0_i32_0 = arith.constant 0 : i32
    return %arg1, %c0_i32 : i32, i32
  }
  func.func @transform_2(%arg0: i32, %arg1: i32) -> (i32, i32) {
    %c0_i32 = arith.constant 0 : i32
    %c0_i32_0 = arith.constant 0 : i32
    return %arg0, %c0_i32 : i32, i32
  }
}

</mosaic_0001>

<llo_original>
// kernel: tpu_custom_call.1
$region0: #{tpu_custom_call.1}
  #allocation0 [shape = 'u32[]', space=smem, size = 0x4, offset = 0x4, fixed_abs, tag = 'smem constant byte address 0x4 - core index']
  #allocation1 [shape = 'u32[144,128]{1,0:T(1,128)}', space=vmem, size = 0x12000, scoped, tag = 'internal scratch']
  #allocation2 [shape = 'f32[16,32]{1,0:T(8,128)}', space=vmem, size = 0x2000, scoped, tag = 'scratch operand']
  %s0 = inlined_call_operand.vmem [shape: s32[16,1], index: 0, kind: input, shape index: {}]
  %s1 = inlined_call_operand.hbm [shape: f32[32,32], index: 1, kind: input, shape index: {}]
  %s2 = inlined_call_operand.hbm [shape: f32[16,32], index: 2, kind: output, shape index: {}]
  %s3 = sld [smem:[#allocation0]]
  $region30: #{tpu_custom_call.1} parent=0
    _
  %s5 = ssub.s32 1, %s3
  %s6 = scalar_select 0, %s5, %s3
  $region1: #{tpu_custom_call.1} parent=0
    #allocation3 [shape = 'u8[16384]{0}', space=vmem, size = 0x4000, scoped, tag = 'input window, operand 1, single buffered']
    #allocation4 [shape = 's32[1]{0}', space=sflag, size = 0x4, scoped, tag = 'scoped memory for tpu_custom_call.1']
    #allocation5 [shape = 's32[1]{0}', space=sflag, size = 0x4, scoped, tag = 'scoped memory for tpu_custom_call.1']
    #allocation6 [shape = 'u8[8192]{0}', space=vmem, size = 0x2000, scoped, tag = 'output window, operand 0, single buffered']
    %7 = vsyncpa [#allocation4], 0
    %8 = vsyncpa [#allocation5], 0
    // Predicated region
    $region2: #{tpu_custom_call.1} parent=1 // pred_check
      _
    $region3: #{tpu_custom_call.1} parent=1 // pred_check_branch
      %10 = sbr.rel (0) target = $region5
    $region4: #{tpu_custom_call.1} parent=1 // pred_region
      _
    $region5: #{tpu_custom_call.1} parent=1 // pred_fallthru
      _
    // Predicated region
    $region6: #{tpu_custom_call.1} parent=1 // pred_check
      _
    $region7: #{tpu_custom_call.1} parent=1 // pred_check_branch
      %12 = sbr.rel (0) target = $region9
    $region8: #{tpu_custom_call.1} parent=1 // pred_region
      %s14 = ssub.s32 512, 512
      %15 = vsyncadd [#allocation4], %s14
      %s16 = sshll.u32 [#allocation3], 4
      %s17 = int_to_ptr.vmem [resolvable:$true] %s16
      %22 = dma.hbm_to_vmem [thread:$0]  %s1, 512, %s17, [#allocation4], 128, 128, 8
    $region9: #{tpu_custom_call.1} parent=1 // pred_fallthru
      _
    // Predicated region
    $region10: #{tpu_custom_call.1} parent=1 // pred_check
      _
    $region11: #{tpu_custom_call.1} parent=1 // pred_check_branch
      %24 = sbr.rel (0) target = $region13
    $region12: #{tpu_custom_call.1} parent=1 // pred_region
      %25 = dma.done [#allocation4], 512
    $region13: #{tpu_custom_call.1} parent=1 // pred_fallthru
      _
    %p26 = scmp.eq.s32.totalorder 0, 0
    // Predicated region
    $region14: #{tpu_custom_call.1} parent=1 // pred_check
      %p27 = pneg %p26
    $region15: #{tpu_custom_call.1} parent=1 // pred_check_branch
      %29 = sbr.rel (%p27) target = $region17
    $region16: #{tpu_custom_call.1} parent=1 // pred_region
      %vm30 = vcmask 261120
      %31 = vst.msk [vmem:[#allocation2] sm:$0xff] %vm30, 0.0
      %32 = vst.msk [vmem:[#allocation2 + $0x8] sm:$0xff] %vm30, 0.0
    $region17: #{tpu_custom_call.1} parent=1 // pred_fallthru
      _
    %s33 = smul.u32 0, 32
    %v34 = vld [vmem:[%s0] sm:$0xff]
    %v35 = vld [vmem:[%s0 + $0x8] sm:$0xff]
    %v36 = vlaneseq
    %v37 = vand.u32 %v36, 127
    %v38 = vstv %s33
    %v39 = vadd.s32 %v38, %v37
    %40 = vset.pattern.permute.xlu0 0
    %41 = vperm.xlu0 %40, %v34
    %v42 = vpop.permute.xlu0 %41
    %43 = vset.pattern.permute.xlu0 0
    %44 = vperm.xlu0 %43, %v35
    %v45 = vpop.permute.xlu0 %44
    %vm46 = vcmp.eq.s32.totalorder %v42, %v39
    %vm47 = vcmp.eq.s32.totalorder %v45, %v39
    %v48 = vsel %vm46, 1, 0
    %v49 = vsel %vm47, 1, 0
    %v50 = vcvt.s32.f32 %v48
    %v51 = vcvt.s32.f32 %v49
    %v52 = vld [vmem:[#allocation2] sm:$0xff]
    %v53 = vld [vmem:[#allocation2 + $0x8] sm:$0xff]
    %v54 = vld [vmem:[#allocation3] sm:$0xff]
    %v55 = vld [vmem:[#allocation3 + $0x8] sm:$0xff]
    %v56 = vld [vmem:[#allocation3 + $0x10] sm:$0xff]
    %v57 = vld [vmem:[#allocation3 + $0x18] sm:$0xff]
    %vm58 = vcmask 261120
    %v60 = vsel %vm58, %v50, 0
    %v63 = vsel %vm58, %v51, 0
    %65 = vmatprep.subr.mxu0 0.0
    %66 = vmatpush1.msra.mxu0 0.0
    %67 = vmatprep.subr.mxu0 0.0
    %68 = vmatpush1.msra.mxu0 0.0
    %69 = vmatprep.subr.mxu0 0.0
    %70 = vmatpush1.msra.mxu0 0.0
    %71 = vmatprep.subr.mxu0 0.0
    %72 = vmatpush1.msra.mxu0 0.0
    %73 = vmatprep.subr.mxu0 0.0
    %74 = vmatpush1.msra.mxu0 0.0
    %75 = vmatprep.subr.mxu0 0.0
    %76 = vmatpush1.msra.mxu0 0.0
    %77 = vmatprep.subr.mxu0 0.0
    %78 = vmatpush1.msra.mxu0 0.0
    %79 = vmatprep.subr.mxu0 0.0
    %80 = vmatpush1.msra.mxu0 0.0
    %81 = vmatprep.subr.mxu0 0.0
    %82 = vmatpush1.msra.mxu0 0.0
    %83 = vmatprep.subr.mxu0 0.0
    %84 = vmatpush1.msra.mxu0 0.0
    %85 = vmatprep.subr.mxu0 0.0
    %86 = vmatpush1.msra.mxu0 0.0
    %87 = vmatprep.subr.mxu0 0.0
    %88 = vmatpush1.msra.mxu0 0.0
    %89 = vmatprep.subr.mxu0 0.0
    %90 = vmatpush1.msra.mxu0 %v57
    %91 = vmatprep.subr.mxu0 0.0
    %92 = vmatpush1.msra.mxu0 %v56
    %93 = vmatprep.subr.mxu0 0.0
    %94 = vmatpush1.msra.mxu0 %v55
    %95 = vmatprep.subr.mxu0 0.0
    %96 = vmatpush1.msra.mxu0 %v54
    %97 = vmatprep.subr.mxu0 0.0
    %98 = vmatpush2.msra.mxu0 0.0
    %99 = vmatprep.subr.mxu0 0.0
    %100 = vmatpush2.msra.mxu0 0.0
    %101 = vmatprep.subr.mxu0 0.0
    %102 = vmatpush2.msra.mxu0 0.0
    %103 = vmatprep.subr.mxu0 0.0
    %104 = vmatpush2.msra.mxu0 0.0
    %105 = vmatprep.subr.mxu0 0.0
    %106 = vmatpush2.msra.mxu0 0.0
    %107 = vmatprep.subr.mxu0 0.0
    %108 = vmatpush2.msra.mxu0 0.0
    %109 = vmatprep.subr.mxu0 0.0
    %110 = vmatpush2.msra.mxu0 0.0
    %111 = vmatprep.subr.mxu0 0.0
    %112 = vmatpush2.msra.mxu0 0.0
    %113 = vmatprep.subr.mxu0 0.0
    %114 = vmatpush2.msra.mxu0 0.0
    %115 = vmatprep.subr.mxu0 0.0
    %116 = vmatpush2.msra.mxu0 0.0
    %117 = vmatprep.subr.mxu0 0.0
    %118 = vmatpush2.msra.mxu0 0.0
    %119 = vmatprep.subr.mxu0 0.0
    %120 = vmatpush2.msra.mxu0 0.0
    %121 = vmatprep.subr.mxu0 0.0
    %122 = vmatpush2.msra.mxu0 0.0
    %123 = vmatprep.subr.mxu0 0.0
    %124 = vmatpush2.msra.mxu0 0.0
    %125 = vmatprep.subr.mxu0 0.0
    %126 = vmatpush2.msra.mxu0 0.0
    %127 = vmatprep.subr.mxu0 0.0
    %128 = vmatpush2.msra.mxu0 0.0
    %129 = vmatprep.mubr.f32.mxu0 0.0
    %130 = vmatmul.mubr.f32.gmra.mxu0 %v60
    %v131 = vpop.f32.mrf.mxu0
    %v132 = vadd.f32 0.0, %v131
    %v133 = vpop.f32.mrf.mxu0
    %134 = vmatprep.mubr.f32.mxu0 0.0
    %135 = vmatmul.mubr.f32.gmra.mxu0 %v63
    %v136 = vpop.f32.mrf.mxu0
    %v137 = vadd.f32 0.0, %v136
    %v138 = vpop.f32.mrf.mxu0
    %139 = vdwg.mxu0
    %v140 = vadd.f32 %v52, %v132
    %v141 = vadd.f32 %v53, %v137
    %142 = vst.msk [vmem:[#allocation2] sm:$0xff] %vm58, %v140
    %143 = vst.msk [vmem:[#allocation2 + $0x8] sm:$0xff] %vm58, %v141
    // Predicated region
    $region18: #{tpu_custom_call.1} parent=1 // pred_check
      %p144 = pneg %p26
    $region19: #{tpu_custom_call.1} parent=1 // pred_check_branch
      %146 = sbr.rel (%p144) target = $region21
    $region20: #{tpu_custom_call.1} parent=1 // pred_region
      %v147 = vld [vmem:[#allocation2] sm:$0xff]
      %v148 = vld [vmem:[#allocation2 + $0x8] sm:$0xff]
      %v149 = vmax.f32 %v147, 0.0
      %v150 = vmax.f32 %v148, 0.0
      %v151 = vand.u32 2147483647, %v147
      %v152 = vand.u32 2147483647, %v148
      %v153 = vsub.f32 0.0, %v151
      %v154 = vsub.f32 0.0, %v152
      %v155 = vmul.f32 %v153, 1.442695
      %v156 = vpow.pop %v155
      %v157 = vmul.f32 %v154, 1.442695
      %v158 = vpow.pop %v157
      %v159 = vadd.f32 %v156, 1.0
      %v160 = vlog2.pop %v159
      %v161 = vmul.f32 %v160, 0.6931472
      %v162 = vmul.f32 -0.5, %v156
      %v163 = vadd.f32 %v162, 1.0
      %v164 = vmul.f32 %v163, %v156
      %v165 = vand.u32 2147483647, %v156
      %vm166 = vcmp.lt.f32.partialorder %v165, 0.0004427343
      %v167 = vsel %vm166, %v164, %v161
      %v168 = vadd.f32 %v158, 1.0
      %v169 = vlog2.pop %v168
      %v170 = vmul.f32 %v169, 0.6931472
      %v171 = vmul.f32 -0.5, %v158
      %v172 = vadd.f32 %v171, 1.0
      %v173 = vmul.f32 %v172, %v158
      %v174 = vand.u32 2147483647, %v158
      %vm175 = vcmp.lt.f32.partialorder %v174, 0.0004427343
      %v176 = vsel %vm175, %v173, %v170
      %v177 = vadd.f32 %v149, %v167
      %v178 = vadd.f32 %v150, %v176
      %179 = vst.msk [vmem:[#allocation6] sm:$0xff] %vm58, %v177
      %180 = vst.msk [vmem:[#allocation6 + $0x8] sm:$0xff] %vm58, %v178
    $region21: #{tpu_custom_call.1} parent=1 // pred_fallthru
      _
    // Predicated region
    $region22: #{tpu_custom_call.1} parent=1 // pred_check
      _
    $region23: #{tpu_custom_call.1} parent=1 // pred_check_branch
      %182 = sbr.rel (0) target = $region25
    $region24: #{tpu_custom_call.1} parent=1 // pred_region
      %s184 = ssub.s32 256, 256
      %185 = vsyncadd [#allocation5], %s184
      %s186 = sshll.u32 [#allocation6], 4
      %s187 = int_to_ptr.vmem [resolvable:$true] %s186
      %192 = dma.vmem_to_hbm [thread:$0]  %s187, 256, %s2, [#allocation5], 128, 128, 8
    $region25: #{tpu_custom_call.1} parent=1 // pred_fallthru
      _
    // Predicated region
    $region26: #{tpu_custom_call.1} parent=1 // pred_check
      _
    $region27: #{tpu_custom_call.1} parent=1 // pred_check_branch
      %194 = sbr.rel (0) target = $region29
    $region28: #{tpu_custom_call.1} parent=1 // pred_region
      %195 = dma.done [#allocation5], 256
    $region29: #{tpu_custom_call.1} parent=1 // pred_fallthru
      _
    %196 = vsyncpa [#allocation4], 1
    %197 = vsyncpa [#allocation5], 1

</llo_original>
